<compile_context>
chip_gen: v5e
topology: v5e:2x2
jax: 0.10.0
libtpu: 0.0.40
codegen_flags: <defaults>
</compile_context>

<pallas_src>
import jax
import jax.numpy as jnp
from jax.experimental import pallas as pl
from jax.experimental.pallas import tpu as pltpu

_LANES = 128
_TARGET_BLOCK_BYTES = 2 * 1024 * 1024  # ~2 MiB per block: ≥85% of HBM roofline,
                                       # tiny fraction of every generation's VMEM.


def _identity_kernel(x_ref, o_ref):
    # Elementwise copy of the current tile (VMEM -> vreg -> VMEM).
    o_ref[...] = x_ref[...]


def _sublane_multiple(dtype):
    itemsize = jnp.dtype(dtype).itemsize
    if itemsize >= 4:
        return 8       # f32 / i32: full vreg is (8, 128)
    elif itemsize == 2:
        return 16      # bf16 packs 2 rows per sublane
    else:
        return 32      # int8 / fp8 pack 4 rows per sublane


def _round_up(x, m):
    return ((x + m - 1) // m) * m


@jax.jit
def identity_forward(x):
    """Identity forward: returns a tensor equal to x (same shape & dtype)."""
    orig_shape = x.shape
    orig_dtype = x.dtype

    total = 1
    for s in orig_shape:
        total *= s
    if total == 0:
        return x

    itemsize = jnp.dtype(orig_dtype).itemsize
    sub = _sublane_multiple(orig_dtype)

    # Lane-dense 2D view: pad flat length to a multiple of 128 lanes so we
    # never fall back to a single whole-array block.
    padded_total = _round_up(total, _LANES)
    flat = x.reshape(total)
    if padded_total != total:
        flat = jnp.pad(flat, (0, padded_total - total))
    rows = padded_total // _LANES
    x2d = flat.reshape(rows, _LANES)

    # Dtype-aware tile rows targeting ~2 MiB per block; clamp for small inputs.
    target_rows = max(sub, (_TARGET_BLOCK_BYTES // (_LANES * itemsize)) // sub * sub)
    tile_rows = min(target_rows, _round_up(rows, sub))
    grid = (pl.cdiv(rows, tile_rows),)  # ragged last block handled by Pallas

    out2d = pl.pallas_call(
        _identity_kernel,
        out_shape=jax.ShapeDtypeStruct((rows, _LANES), orig_dtype),
        grid_spec=pltpu.PrefetchScalarGridSpec(
            num_scalar_prefetch=0,
            grid=grid,
            in_specs=[pl.BlockSpec((tile_rows, _LANES), lambda i: (i, 0))],
            out_specs=pl.BlockSpec((tile_rows, _LANES), lambda i: (i, 0)),
        ),
        input_output_aliases={0: 0},  # output reuses the input HBM buffer
        compiler_params=pltpu.CompilerParams(
            dimension_semantics=("parallel",),      # megacore-shardable on v7x
            vmem_limit_bytes=32 * 1024 * 1024,      # safe on v7x (64 MiB) & v5e/v6e
        ),
    )(x2d)

    out_flat = out2d.reshape(padded_total)
    if padded_total != total:
        out_flat = out_flat[:total]
    return out_flat.reshape(orig_shape)


if __name__ == "__main__":
    key = jax.random.PRNGKey(0)

    # NCDHW: batch=2, channels=4, depth=4, H=8, W=8 (total = 2048 = 16*128)
    x = jax.random.normal(key, (2, 4, 4, 8, 8), dtype=jnp.float32)
    y = jax.block_until_ready(identity_forward(x))
    assert y.shape == x.shape
    assert y.dtype == x.dtype
    assert bool(jnp.all(y == x))

    # Also exercise the padded / sub-32-bit path: total=105 (not a multiple of 128).
    x2 = jax.random.normal(jax.random.PRNGKey(1), (3, 5, 7), dtype=jnp.bfloat16)
    y2 = jax.block_until_ready(identity_forward(x2))
    assert y2.shape == x2.shape
    assert y2.dtype == x2.dtype
    assert bool(jnp.all(y2 == x2))

    print("KERNEL_OK")
</pallas_src>

<mosaic_0001>
module attributes {stable_mosaic.version = 11 : i64} {
  func.func @_identity_kernel(%arg0: i32, %arg1: memref<16x128xf32, #tpu.memory_space<vmem>>, %arg2: memref<16x128xf32, #tpu.memory_space<vmem>>) attributes {dimension_semantics = [#tpu.dimension_semantics<parallel>], iteration_bounds = array<i64: 1>, scalar_prefetch = 0 : i64, scratch_operands = 0 : i64, tpu.core_type = #tpu.core_type<tc>, window_params = [{transform_indices = @transform_0, window_bounds = array<i64: 16, 128>}, {transform_indices = @transform_1, window_bounds = array<i64: 16, 128>}]} {
    %c0 = arith.constant 0 : index
    %c0_0 = arith.constant 0 : index
    %0 = vector.load %arg1[%c0, %c0_0] : memref<16x128xf32, #tpu.memory_space<vmem>>, vector<16x128xf32>
    %c0_1 = arith.constant 0 : index
    %c0_2 = arith.constant 0 : index
    %1 = vector.load %arg2[%c0_1, %c0_2] : memref<16x128xf32, #tpu.memory_space<vmem>>, vector<16x128xf32>
    tpu.vector_store %arg2[%c0_1, %c0_2], %0 {strides = array<i32>} : memref<16x128xf32, #tpu.memory_space<vmem>>, vector<16x128xf32>,
    return
  }
  func.func @transform_0(%arg0: i32) -> (i32, i32) {
    %c0_i32 = arith.constant 0 : i32
    %c0_i32_0 = arith.constant 0 : i32
    return %arg0, %c0_i32 : i32, i32
  }
  func.func @transform_1(%arg0: i32) -> (i32, i32) {
    %c0_i32 = arith.constant 0 : i32
    %c0_i32_0 = arith.constant 0 : i32
    return %arg0, %c0_i32 : i32, i32
  }
}

</mosaic_0001>

<llo_original>
// kernel: identity_forward.1
$region0: #{identity_forward.1}
  #allocation0 [shape = 'u32[]', space=smem, size = 0x4, offset = 0x4, fixed_abs, tag = 'smem constant byte address 0x4 - core index']
  #allocation1 [shape = 'u32[72,128]{1,0:T(1,128)}', space=vmem, size = 0x9000, scoped, tag = 'internal scratch']
  %s0 = inlined_call_operand.vmem [shape: f32[16,128], index: 0, kind: input, shape index: {}, may-alias: {0,1}]
  %s1 = inlined_call_operand.vmem [shape: f32[16,128], index: 1, kind: output, shape index: {}, may-alias: {0,1}]
  %s2 = sld [smem:[#allocation0]]
  $region14: #{identity_forward.1} parent=0
    _
  %s4 = ssub.s32 1, %s2
  %s5 = scalar_select 0, %s4, %s2
  // Predicated region
  $region2: #{identity_forward.1} parent=0 // pred_check
    _
  $region3: #{identity_forward.1} parent=0 // pred_check_branch
    %7 = sbr.rel (0) target = $region5
  $region4: #{identity_forward.1} parent=0 // pred_region
    _
  $region5: #{identity_forward.1} parent=0 // pred_fallthru
    _
  %v8 = vld [vmem:[%s0] sm:$0xff]
  %v9 = vld [vmem:[%s0 + $0x8] sm:$0xff]
  %10 = vst [vmem:[%s1] sm:$0xff] %v8
  %11 = vst [vmem:[%s1 + $0x8] sm:$0xff] %v9
  // Predicated region
  $region6: #{identity_forward.1} parent=0 // pred_check
    _
  $region7: #{identity_forward.1} parent=0 // pred_check_branch
    %13 = sbr.rel (0) target = $region9
  $region8: #{identity_forward.1} parent=0 // pred_region
    _
  $region9: #{identity_forward.1} parent=0 // pred_fallthru
    _
  // Predicated region
  $region10: #{identity_forward.1} parent=0 // pred_check
    _
  $region11: #{identity_forward.1} parent=0 // pred_check_branch
    %15 = sbr.rel (0) target = $region13
  $region12: #{identity_forward.1} parent=0 // pred_region
    _
  $region13: #{identity_forward.1} parent=0 // pred_fallthru
    _

</llo_original>
